<compile_context>
chip_gen: v5e
topology: v5e:2x2
jax: 0.10.0
libtpu: 0.0.40
codegen_flags: <defaults>
</compile_context>

<pallas_src>
import functools

import jax
import jax.numpy as jnp
from jax import lax
from jax.experimental import pallas as pl
from jax.experimental.pallas import tpu as pltpu

EPS = 1e-5


def _bn_kernel(x_ref, gamma_ref, beta_ref, o_ref):
    """One grid step = one band. Tile = (T, N, C, freq); gamma/beta tiles = (C, 1)."""
    x = x_ref[...].astype(jnp.float32)                      # (T, N, C, F)
    n_elems = x.shape[0] * x.shape[1] * x.shape[3]          # static: T * N * F
    inv_n = 1.0 / n_elems

    # Fused one-pass statistics per channel (axis 2 = C).
    s1 = jnp.sum(x, axis=(0, 1, 3), keepdims=True)          # (1, 1, C, 1)
    s2 = jnp.sum(x * x, axis=(0, 1, 3), keepdims=True)      # (1, 1, C, 1)
    mean = s1 * inv_n
    var = jnp.maximum(s2 * inv_n - mean * mean, 0.0)        # biased var, clamp >= 0
    inv_std = lax.rsqrt(var + EPS)

    scale = inv_std * gamma_ref[...]                        # (C,1) -> broadcasts
    shift = beta_ref[...] - mean * scale
    o_ref[...] = (x * scale + shift).astype(o_ref.dtype)


def _round_up(v, m):
    return -(-v // m) * m


@functools.partial(jax.jit, static_argnames=())
def spectrogram_norm(inputs, gamma, beta):
    """inputs: (T, N, bands, C, freq); gamma/beta: (bands*C,). Returns same shape."""
    T, N, bands, C, freq = inputs.shape
    channels = bands * C
    assert gamma.shape == (channels,) and beta.shape == (channels,)

    # Per-band affine params shaped so they broadcast against (1,1,C,1) stats.
    g = gamma.astype(jnp.float32).reshape(bands, C, 1)
    b = beta.astype(jnp.float32).reshape(bands, C, 1)

    # VMEM budget with headroom (v7x: 64 MiB physical, 32 MiB scoped default).
    lane_pad = _round_up(freq, 128)
    sub_pad = _round_up(C, 8)
    itemsize = max(jnp.dtype(inputs.dtype).itemsize, 4)
    tile_bytes = T * N * sub_pad * lane_pad * itemsize      # one padded band tile
    vmem_limit = int(min(max(8 * tile_bytes + (4 << 20), 16 << 20), 48 << 20))
    # TODO(synk): for very large T*N, add an inner "arbitrary" grid axis over T with a
    # two-phase (accumulate stats, then normalize) structure instead of one full tile.

    x_spec = pl.BlockSpec(
        (T, N, None, C, freq),          # band axis squeezed; (C, freq) are full dims
        lambda bi: (0, 0, bi, 0, 0),
    )
    p_spec = pl.BlockSpec(
        (None, C, 1),
        lambda bi: (bi, 0, 0),
    )

    out = pl.pallas_call(
        _bn_kernel,
        out_shape=jax.ShapeDtypeStruct(inputs.shape, inputs.dtype),
        grid=(bands,),
        in_specs=[x_spec, p_spec, p_spec],
        out_specs=x_spec,
        compiler_params=pltpu.CompilerParams(
            dimension_semantics=("parallel",),   # shards the 2 bands across v7x's 2 TCs
            vmem_limit_bytes=vmem_limit,
        ),
    )(inputs, g, b)
    return out


def _reference(inputs, gamma, beta):
    """Pure-JAX reference matching torch BatchNorm2d (training mode) semantics."""
    T, N, bands, C, freq = inputs.shape
    channels = bands * C
    x = jnp.transpose(inputs, (1, 2, 3, 4, 0)).reshape(N, channels, freq, T)
    x32 = x.astype(jnp.float32)
    mean = jnp.mean(x32, axis=(0, 2, 3), keepdims=True)
    var = jnp.mean((x32 - mean) ** 2, axis=(0, 2, 3), keepdims=True)
    y = (x32 - mean) / jnp.sqrt(var + EPS)
    y = y * gamma.reshape(1, channels, 1, 1) + beta.reshape(1, channels, 1, 1)
    y = y.astype(inputs.dtype).reshape(N, bands, C, freq, T)
    return jnp.transpose(y, (4, 0, 1, 2, 3))


if __name__ == "__main__":
    # Small shapes consistent with the module: T=8, N=2, bands=2, C=4, freq=16
    T, N, bands, C, freq = 8, 2, 2, 4, 16
    channels = bands * C

    key = jax.random.PRNGKey(0)
    x = jax.random.normal(key, (T, N, bands, C, freq), dtype=jnp.float32)

    # Deterministic (non-trivial) affine parameters for the BatchNorm.
    gamma = 1.0 + 0.1 * jnp.arange(channels, dtype=jnp.float32)
    beta = 0.05 * jnp.arange(channels, dtype=jnp.float32)

    out = spectrogram_norm(x, gamma, beta)
    out = jax.block_until_ready(out)

    ref = _reference(x, gamma, beta)
    assert out.shape == (T, N, bands, C, freq)
    assert jnp.allclose(out, ref, atol=1e-4, rtol=1e-4)

    print("KERNEL_OK")
</pallas_src>

<mosaic_0001>
module attributes {stable_mosaic.version = 11 : i64} {
  func.func @_bn_kernel(%arg0: i32, %arg1: memref<8x2x1x4x16xf32, #tpu.memory_space<vmem>>, %arg2: memref<1x4x1xf32, #tpu.memory_space<vmem>>, %arg3: memref<1x4x1xf32, #tpu.memory_space<vmem>>, %arg4: memref<8x2x1x4x16xf32, #tpu.memory_space<vmem>>) attributes {dimension_semantics = [#tpu.dimension_semantics<parallel>], iteration_bounds = array<i64: 2>, scalar_prefetch = 0 : i64, scratch_operands = 0 : i64, tpu.core_type = #tpu.core_type<tc>, window_params = [{transform_indices = @transform_0, window_bounds = array<i64: 8, 2, 1, 4, 16>}, {transform_indices = @transform_1, window_bounds = array<i64: 1, 4, 1>}, {transform_indices = @transform_2, window_bounds = array<i64: 1, 4, 1>}, {transform_indices = @transform_3, window_bounds = array<i64: 8, 2, 1, 4, 16>}]} {
    %c0 = arith.constant 0 : index
    %c0_0 = arith.constant 0 : index
    %c0_1 = arith.constant 0 : index
    %c0_2 = arith.constant 0 : index
    %c0_3 = arith.constant 0 : index
    %0 = vector.load %arg1[%c0, %c0_0, %c0_1, %c0_2, %c0_3] : memref<8x2x1x4x16xf32, #tpu.memory_space<vmem>>, vector<8x2x1x4x16xf32>
    %1 = vector.shape_cast %0 : vector<8x2x1x4x16xf32> to vector<8x2x4x16xf32>
    %cst = arith.constant dense<0.000000e+00> : vector<4xf32>
    %2 = vector.multi_reduction <add>, %1, %cst [0, 1, 3] : vector<8x2x4x16xf32> to vector<4xf32>
    %3 = vector.shape_cast %2 : vector<4xf32> to vector<1x1x4x1xf32>
    %4 = arith.mulf %1, %1 : vector<8x2x4x16xf32>
    %cst_4 = arith.constant dense<0.000000e+00> : vector<4xf32>
    %5 = vector.multi_reduction <add>, %4, %cst_4 [0, 1, 3] : vector<8x2x4x16xf32> to vector<4xf32>
    %6 = vector.shape_cast %5 : vector<4xf32> to vector<1x1x4x1xf32>
    %cst_5 = arith.constant 3.906250e-03 : f32
    %7 = vector.broadcast %cst_5 : f32 to vector<1x1x4x1xf32>
    %8 = arith.mulf %3, %7 : vector<1x1x4x1xf32>
    %cst_6 = arith.constant 3.906250e-03 : f32
    %9 = vector.broadcast %cst_6 : f32 to vector<1x1x4x1xf32>
    %10 = arith.mulf %6, %9 : vector<1x1x4x1xf32>
    %11 = arith.mulf %8, %8 : vector<1x1x4x1xf32>
    %12 = arith.subf %10, %11 : vector<1x1x4x1xf32>
    %cst_7 = arith.constant 0.000000e+00 : f32
    %13 = vector.broadcast %cst_7 : f32 to vector<1x1x4x1xf32>
    %14 = arith.maximumf %12, %13 : vector<1x1x4x1xf32>
    %cst_8 = arith.constant 9.99999974E-6 : f32
    %15 = vector.broadcast %cst_8 : f32 to vector<1x1x4x1xf32>
    %16 = arith.addf %14, %15 : vector<1x1x4x1xf32>
    %17 = math.rsqrt %16 : vector<1x1x4x1xf32>
    %c0_9 = arith.constant 0 : index
    %c0_10 = arith.constant 0 : index
    %c0_11 = arith.constant 0 : index
    %18 = vector.load %arg2[%c0_9, %c0_10, %c0_11] : memref<1x4x1xf32, #tpu.memory_space<vmem>>, vector<1x4x1xf32>
    %19 = vector.shape_cast %18 : vector<1x4x1xf32> to vector<4x1xf32>
    %20 = vector.shape_cast %19 : vector<4x1xf32> to vector<1x1x4x1xf32>
    %21 = arith.mulf %17, %20 : vector<1x1x4x1xf32>
    %c0_12 = arith.constant 0 : index
    %c0_13 = arith.constant 0 : index
    %c0_14 = arith.constant 0 : index
    %22 = vector.load %arg3[%c0_12, %c0_13, %c0_14] : memref<1x4x1xf32, #tpu.memory_space<vmem>>, vector<1x4x1xf32>
    %23 = vector.shape_cast %22 : vector<1x4x1xf32> to vector<4x1xf32>
    %24 = arith.mulf %8, %21 : vector<1x1x4x1xf32>
    %25 = vector.shape_cast %23 : vector<4x1xf32> to vector<1x1x4x1xf32>
    %26 = arith.subf %25, %24 : vector<1x1x4x1xf32>
    %27 = vector.broadcast %21 : vector<1x1x4x1xf32> to vector<8x2x4x16xf32>
    %28 = arith.mulf %1, %27 : vector<8x2x4x16xf32>
    %29 = vector.broadcast %26 : vector<1x1x4x1xf32> to vector<8x2x4x16xf32>
    %30 = arith.addf %28, %29 : vector<8x2x4x16xf32>
    %c0_15 = arith.constant 0 : index
    %c0_16 = arith.constant 0 : index
    %c0_17 = arith.constant 0 : index
    %c0_18 = arith.constant 0 : index
    %c0_19 = arith.constant 0 : index
    %31 = vector.load %arg4[%c0_15, %c0_16, %c0_17, %c0_18, %c0_19] : memref<8x2x1x4x16xf32, #tpu.memory_space<vmem>>, vector<8x2x1x4x16xf32>
    %32 = vector.shape_cast %31 : vector<8x2x1x4x16xf32> to vector<8x2x4x16xf32>
    %33 = vector.shape_cast %30 : vector<8x2x4x16xf32> to vector<8x2x1x4x16xf32>
    tpu.vector_store %arg4[%c0_15, %c0_16, %c0_17, %c0_18, %c0_19], %33 {strides = array<i32>} : memref<8x2x1x4x16xf32, #tpu.memory_space<vmem>>, vector<8x2x1x4x16xf32>,
    return
  }
  func.func @transform_0(%arg0: i32) -> (i32, i32, i32, i32, i32) {
    %c0_i32 = arith.constant 0 : i32
    %c0_i32_0 = arith.constant 0 : i32
    %c0_i32_1 = arith.constant 0 : i32
    %c0_i32_2 = arith.constant 0 : i32
    %c0_i32_3 = arith.constant 0 : i32
    return %c0_i32, %c0_i32_0, %arg0, %c0_i32_1, %c0_i32_2 : i32, i32, i32, i32, i32
  }
  func.func @transform_1(%arg0: i32) -> (i32, i32, i32) {
    %c0_i32 = arith.constant 0 : i32
    %c0_i32_0 = arith.constant 0 : i32
    %c0_i32_1 = arith.constant 0 : i32
    return %arg0, %c0_i32, %c0_i32_0 : i32, i32, i32
  }
  func.func @transform_2(%arg0: i32) -> (i32, i32, i32) {
    %c0_i32 = arith.constant 0 : i32
    %c0_i32_0 = arith.constant 0 : i32
    %c0_i32_1 = arith.constant 0 : i32
    return %arg0, %c0_i32, %c0_i32_0 : i32, i32, i32
  }
  func.func @transform_3(%arg0: i32) -> (i32, i32, i32, i32, i32) {
    %c0_i32 = arith.constant 0 : i32
    %c0_i32_0 = arith.constant 0 : i32
    %c0_i32_1 = arith.constant 0 : i32
    %c0_i32_2 = arith.constant 0 : i32
    %c0_i32_3 = arith.constant 0 : i32
    return %c0_i32, %c0_i32_0, %arg0, %c0_i32_1, %c0_i32_2 : i32, i32, i32, i32, i32
  }
}

</mosaic_0001>

<llo_original>
// kernel: spectrogram_norm.1
$region0: #{spectrogram_norm.1}
  #allocation0 [shape = 'u32[]', space=smem, size = 0x4, offset = 0x4, fixed_abs, tag = 'smem constant byte address 0x4 - core index']
  #allocation1 [shape = 'u32[72,128]{1,0:T(1,128)}', space=vmem, size = 0x9000, scoped, tag = 'internal scratch']
  %s0 = inlined_call_operand.hbm [shape: f32[8,2,2,4,16], index: 0, kind: input, shape index: {}]
  %s1 = inlined_call_operand.vmem [shape: f32[2,4,1], index: 1, kind: input, shape index: {}]
  %s2 = inlined_call_operand.vmem [shape: f32[2,4,1], index: 2, kind: input, shape index: {}]
  %s3 = inlined_call_operand.hbm [shape: f32[8,2,2,4,16], index: 3, kind: output, shape index: {}]
  %s4 = sld [smem:[#allocation0]]
  $region49: #{spectrogram_norm.1} parent=0
    _
  %s6 = ssub.s32 1, %s4
  %s7 = scalar_select 0, %s6, %s4
  $region1: #{spectrogram_norm.1} parent=0
    #allocation2 [shape = 'u8[65536]{0}', space=vmem, size = 0x10000, scoped, tag = 'input window, operand 0']
    #allocation3 [shape = 's32[2]{0}', space=sflag, size = 0x8, scoped, tag = 'scoped memory for spectrogram_norm.1']
    #allocation4 [shape = 's32[2]{0}', space=sflag, size = 0x8, scoped, tag = 'scoped memory for spectrogram_norm.1']
    #allocation5 [shape = 'u8[65536]{0}', space=vmem, size = 0x10000, scoped, tag = 'output window, operand 0']
    %8 = vsyncpa [#allocation3], 0
    %s9 = scalar_lea.sflag [#allocation3], 1
    %10 = vsyncpa %s9, 0
    %11 = vsyncpa [#allocation4], 0
    %s12 = scalar_lea.sflag [#allocation4], 1
    %13 = vsyncpa %s12, 0
    loop: start=0, step=1, limit=4
    $region2: #{spectrogram_norm.1} parent=1 // loop_pre_header
      _
    $region3: #{spectrogram_norm.1} parent=1 // loop_header
      %s15 = sphi 0, %s19
      %p16 = scmp.ge.s32.totalorder %s15, 4
      %s25 = sphi 0, %s27
      %s28 = sphi 0, %s25
      %s29 = sphi 0, %s28
      %s45 = sphi 0, %s29
      %s51 = sphi 0, %s53
      %s54 = sphi 0, %s51
      %s55 = sphi 0, %s54
      %s71 = sphi 0, %s55
      %s77 = sphi 0, %s79
      %s80 = sphi 0, %s77
      %s81 = sphi 0, %s80
      %s97 = sphi 0, %s81
      %s103 = sphi 0, %s105
      %s106 = sphi 0, %s103
      %s107 = sphi 0, %s106
      %s123 = sphi 0, %s107
    $region4: #{spectrogram_norm.1} parent=1 // loop_header_branch
      %18 = sbr.rel (%p16) target = $region8
    $region5: #{spectrogram_norm.1} parent=1 // loop_body
      %s20 = ssub.s32 %s15, 1
      %s21 = ssub.s32 %s15, 2
      %s22 = sadd.s32 %s15, 1
      %s23 = ssub.s32 %s15, %s22
      %p24 = scmp.eq.s32.totalorder %s23, 0
      %s26 = sadd.s32 %s25, 1
      %s27 = scalar_select %p24, %s25, %s26
      %p30 = pneg %p24
      %p31 = scmp.eq.s32.totalorder %s15, 1
      %p32 = por %p30, %p31
      %p33 = scmp.ne.s32.totalorder %s25, %s28
      %p34 = scmp.eq.s32.totalorder %s15, 0
      %p35 = por %p33, %p34
      %p36 = scmp.ne.s32.totalorder %s25, %s28
      %p37 = scmp.eq.s32.totalorder %s20, 1
      %p38 = por %p36, %p37
      %p39 = scmp.ne.s32.totalorder %s28, %s29
      %p40 = scmp.eq.s32.totalorder %s20, 0
      %p41 = por %p39, %p40
      %p42 = scmp.ne.s32.totalorder %s28, %s29
      %p43 = scmp.eq.s32.totalorder %s21, 1
      %p44 = por %p42, %p43
      %p46 = scmp.ne.s32.totalorder %s29, %s45
      %p47 = scmp.eq.s32.totalorder %s21, 0
      %p48 = por %p46, %p47
      %s49 = ssub.s32 %s15, %s22
      %p50 = scmp.eq.s32.totalorder %s49, 0
      %s52 = sadd.s32 %s51, 1
      %s53 = scalar_select %p50, %s51, %s52
      %p56 = pneg %p50
      %p57 = scmp.eq.s32.totalorder %s15, 1
      %p58 = por %p56, %p57
      %p59 = scmp.ne.s32.totalorder %s51, %s54
      %p60 = scmp.eq.s32.totalorder %s15, 0
      %p61 = por %p59, %p60
      %p62 = scmp.ne.s32.totalorder %s51, %s54
      %p63 = scmp.eq.s32.totalorder %s20, 1
      %p64 = por %p62, %p63
      %p65 = scmp.ne.s32.totalorder %s54, %s55
      %p66 = scmp.eq.s32.totalorder %s20, 0
      %p67 = por %p65, %p66
      %p68 = scmp.ne.s32.totalorder %s54, %s55
      %p69 = scmp.eq.s32.totalorder %s21, 1
      %p70 = por %p68, %p69
      %p72 = scmp.ne.s32.totalorder %s55, %s71
      %p73 = scmp.eq.s32.totalorder %s21, 0
      %p74 = por %p72, %p73
      %s75 = ssub.s32 %s15, %s22
      %p76 = scmp.eq.s32.totalorder %s75, 0
      %s78 = sadd.s32 %s77, 1
      %s79 = scalar_select %p76, %s77, %s78
      %p82 = pneg %p76
      %p83 = scmp.eq.s32.totalorder %s15, 1
      %p84 = por %p82, %p83
      %p85 = scmp.ne.s32.totalorder %s77, %s80
      %p86 = scmp.eq.s32.totalorder %s15, 0
      %p87 = por %p85, %p86
      %p88 = scmp.ne.s32.totalorder %s77, %s80
      %p89 = scmp.eq.s32.totalorder %s20, 1
      %p90 = por %p88, %p89
      %p91 = scmp.ne.s32.totalorder %s80, %s81
      %p92 = scmp.eq.s32.totalorder %s20, 0
      %p93 = por %p91, %p92
      %p94 = scmp.ne.s32.totalorder %s80, %s81
      %p95 = scmp.eq.s32.totalorder %s21, 1
      %p96 = por %p94, %p95
      %p98 = scmp.ne.s32.totalorder %s81, %s97
      %p99 = scmp.eq.s32.totalorder %s21, 0
      %p100 = por %p98, %p99
      %s101 = ssub.s32 %s15, %s22
      %p102 = scmp.eq.s32.totalorder %s101, 0
      %s104 = sadd.s32 %s103, 1
      %s105 = scalar_select %p102, %s103, %s104
      %p108 = pneg %p102
      %p109 = scmp.eq.s32.totalorder %s15, 1
      %p110 = por %p108, %p109
      %p111 = scmp.ne.s32.totalorder %s103, %s106
      %p112 = scmp.eq.s32.totalorder %s15, 0
      %p113 = por %p111, %p112
      %p114 = scmp.ne.s32.totalorder %s103, %s106
      %p115 = scmp.eq.s32.totalorder %s20, 1
      %p116 = por %p114, %p115
      %p117 = scmp.ne.s32.totalorder %s106, %s107
      %p118 = scmp.eq.s32.totalorder %s20, 0
      %p119 = por %p117, %p118
      %p120 = scmp.ne.s32.totalorder %s106, %s107
      %p121 = scmp.eq.s32.totalorder %s21, 1
      %p122 = por %p120, %p121
      %p124 = scmp.ne.s32.totalorder %s107, %s123
      %p125 = scmp.eq.s32.totalorder %s21, 0
      %p126 = por %p124, %p125
      %p127 = scmp.le.s32.totalorder 1, %s15
      %p128 = scmp.lt.s32.totalorder %s15, 3
      %p129 = pnand %p127, %p128
      %p130 = pneg %p129
      // Predicated region
      $region9: #{spectrogram_norm.1} parent=5 // pred_check
        _
      $region10: #{spectrogram_norm.1} parent=5 // pred_check_branch
        %132 = sbr.rel (%p129) target = $region12
      $region11: #{spectrogram_norm.1} parent=5 // pred_region
        %s133 = ssub.s32 %s15, 1
      $region12: #{spectrogram_norm.1} parent=5 // pred_fallthru
        _
      %p134 = scmp.lt.s32.totalorder %s15, 2
      // Predicated region
      $region13: #{spectrogram_norm.1} parent=5 // pred_check
        %p135 = pneg %p134
      $region14: #{spectrogram_norm.1} parent=5 // pred_check_branch
        %137 = sbr.rel (%p135) target = $region16
      $region15: #{spectrogram_norm.1} parent=5 // pred_region
        // Predicated region
        $region17: #{spectrogram_norm.1} parent=15 // pred_check
          %p138 = pneg %p35
        $region18: #{spectrogram_norm.1} parent=15 // pred_check_branch
          %140 = sbr.rel (%p138) target = $region20
        $region19: #{spectrogram_norm.1} parent=15 // pred_region
          %s141 = sand.u32 %s25, 1
          %s142 = scalar_lea.sflag [#allocation3], %s141
          %s143 = sand.u32 %s25, 1
          %s144 = smul.addr %s143, 64
          %s145 = scalar_lea.vmem [#allocation2], %s144
          %147 = vsyncadd %s142, 0
          %s148 = smul.addr %s15, 4
          %s149 = scalar_lea.hbm %s0, %s148
          %s150 = sshll.u32 %s149, 4
          %s151 = int_to_ptr.hbm [resolvable:$true] %s150
          %s152 = sshll.u32 %s145, 4
          %s153 = int_to_ptr.vmem [resolvable:$true] %s152
          %158 = dma.hbm_to_vmem [thread:$0]  %s151, 1024, %s153, %s142, 128, 64, 4
        $region20: #{spectrogram_norm.1} parent=15 // pred_fallthru
          _
        // Predicated region
        $region21: #{spectrogram_norm.1} parent=15 // pred_check
          %p159 = pneg %p61
        $region22: #{spectrogram_norm.1} parent=15 // pred_check_branch
          %161 = sbr.rel (%p159) target = $region24
        $region23: #{spectrogram_norm.1} parent=15 // pred_region
          %p162 = scmp.lt.s32.totalorder %s15, 1
          %s163 = scalar_select %p162, %s15, 1
          %s164 = smul.addr %s163, 4
          %s165 = scalar_lea.vmem %s1, %s164
        $region24: #{spectrogram_norm.1} parent=15 // pred_fallthru
          _
        // Predicated region
        $region25: #{spectrogram_norm.1} parent=15 // pred_check
          %p166 = pneg %p87
        $region26: #{spectrogram_norm.1} parent=15 // pred_check_branch
          %168 = sbr.rel (%p166) target = $region28
        $region27: #{spectrogram_norm.1} parent=15 // pred_region
          %p169 = scmp.lt.s32.totalorder %s15, 1
          %s170 = scalar_select %p169, %s15, 1
          %s171 = smul.addr %s170, 4
          %s172 = scalar_lea.vmem %s2, %s171
        $region28: #{spectrogram_norm.1} parent=15 // pred_fallthru
          _
      $region16: #{spectrogram_norm.1} parent=5 // pred_fallthru
        _
      %p173 = scmp.le.s32.totalorder 1, %s15
      %p174 = scmp.lt.s32.totalorder %s15, 3
      %p175 = pnand %p173, %p174
      %p176 = pneg %p175
      // Predicated region
      $region29: #{spectrogram_norm.1} parent=5 // pred_check
        _
      $region30: #{spectrogram_norm.1} parent=5 // pred_check_branch
        %178 = sbr.rel (%p175) target = $region32
      $region31: #{spectrogram_norm.1} parent=5 // pred_region
        %s179 = ssub.s32 %s15, 1
        %s180 = sand.u32 %s28, 1
        %s181 = scalar_lea.sflag [#allocation3], %s180
        %s182 = sand.u32 %s28, 1
        %s183 = smul.addr %s182, 64
        %s184 = scalar_lea.vmem [#allocation2], %s183
        // Predicated region
        $region33: #{spectrogram_norm.1} parent=31 // pred_check
          %p185 = pneg %p41
        $region34: #{spectrogram_norm.1} parent=31 // pred_check_branch
          %187 = sbr.rel (%p185) target = $region36
        $region35: #{spectrogram_norm.1} parent=31 // pred_region
          %189 = dma.done %s181, 1024
        $region36: #{spectrogram_norm.1} parent=31 // pred_fallthru
          _
        %s190 = sand.u32 %s28, 1
        %s191 = scalar_lea.sflag [#allocation3], %s190
        %s192 = sand.u32 %s28, 1
        %s193 = smul.addr %s192, 64
        %s194 = scalar_lea.vmem [#allocation2], %s193
        %p195 = pneg %p41
        %p196 = pneg %p38
        %p197 = scmp.lt.s32.totalorder %s20, 1
        %s198 = scalar_select %p197, %s20, 1
        %s199 = smul.addr %s198, 4
        %s200 = scalar_lea.vmem %s1, %s199
        %p201 = pneg %p67
        %p202 = pneg %p64
        %p203 = scmp.lt.s32.totalorder %s20, 1
        %s204 = scalar_select %p203, %s20, 1
        %s205 = smul.addr %s204, 4
        %s206 = scalar_lea.vmem %s2, %s205
        %p207 = pneg %p93
        %p208 = pneg %p90
        %p209 = pneg %p119
        %p210 = pneg %p116
        %s211 = sand.u32 %s106, 1
        %s212 = scalar_lea.sflag [#allocation4], %s211
        %s213 = sand.u32 %s106, 1
        %s214 = smul.addr %s213, 64
        %s215 = scalar_lea.vmem [#allocation5], %s214
        %p216 = scmp.lt.s32.totalorder %s20, 1
        %s217 = scalar_select %p216, %s20, 1
        %s218 = smul.addr %s217, 4
        %s219 = scalar_lea.vmem %s1, %s218
        %p220 = scmp.lt.s32.totalorder %s20, 1
        %s221 = scalar_select %p220, %s20, 1
        %s222 = smul.addr %s221, 4
        %s223 = scalar_lea.vmem %s2, %s222
        %v224 = vld [vmem:[%s184] sm:$0xf]
        %v225 = vld [vmem:[%s184 + $0x4] sm:$0xf]
        %v226 = vld [vmem:[%s184 + $0x8] sm:$0xf]
        %v227 = vld [vmem:[%s184 + $0xc] sm:$0xf]
        %v228 = vld [vmem:[%s184 + $0x10] sm:$0xf]
        %v229 = vld [vmem:[%s184 + $0x14] sm:$0xf]
        %v230 = vld [vmem:[%s184 + $0x18] sm:$0xf]
        %v231 = vld [vmem:[%s184 + $0x1c] sm:$0xf]
        %v232 = vld [vmem:[%s184 + $0x20] sm:$0xf]
        %v233 = vld [vmem:[%s184 + $0x24] sm:$0xf]
        %v234 = vld [vmem:[%s184 + $0x28] sm:$0xf]
        %v235 = vld [vmem:[%s184 + $0x2c] sm:$0xf]
        %v236 = vld [vmem:[%s184 + $0x30] sm:$0xf]
        %v237 = vld [vmem:[%s184 + $0x34] sm:$0xf]
        %v238 = vld [vmem:[%s184 + $0x38] sm:$0xf]
        %v239 = vld [vmem:[%s184 + $0x3c] sm:$0xf]
        %vm240 = vcmask 125952
        %v241 = vsel %vm240, %v224, 0.0
        %v242 = vsel %vm240, %v225, 0.0
        %v243 = vadd.f32 %v241, %v242
        %v244 = vsel %vm240, %v226, 0.0
        %v245 = vadd.f32 %v243, %v244
        %v246 = vsel %vm240, %v227, 0.0
        %v247 = vadd.f32 %v245, %v246
        %v248 = vsel %vm240, %v228, 0.0
        %v249 = vadd.f32 %v247, %v248
        %v250 = vsel %vm240, %v229, 0.0
        %v251 = vadd.f32 %v249, %v250
        %v252 = vsel %vm240, %v230, 0.0
        %v253 = vadd.f32 %v251, %v252
        %v254 = vsel %vm240, %v231, 0.0
        %v255 = vadd.f32 %v253, %v254
        %v256 = vsel %vm240, %v232, 0.0
        %v257 = vadd.f32 %v255, %v256
        %v258 = vsel %vm240, %v233, 0.0
        %v259 = vadd.f32 %v257, %v258
        %v260 = vsel %vm240, %v234, 0.0
        %v261 = vadd.f32 %v259, %v260
        %v262 = vsel %vm240, %v235, 0.0
        %v263 = vadd.f32 %v261, %v262
        %v264 = vsel %vm240, %v236, 0.0
        %v265 = vadd.f32 %v263, %v264
        %v266 = vsel %vm240, %v237, 0.0
        %v267 = vadd.f32 %v265, %v266
        %v268 = vsel %vm240, %v238, 0.0
        %v269 = vadd.f32 %v267, %v268
        %v270 = vsel %vm240, %v239, 0.0
        %v271 = vadd.f32 %v269, %v270
        %272 = vadd.xlane.f32.xlu0 %v271
        %v273 = vpop.xlane.xlu0 %272
        %v274 = vmul.f32 %v224, %v224
        %v275 = vmul.f32 %v225, %v225
        %v276 = vmul.f32 %v226, %v226
        %v277 = vmul.f32 %v227, %v227
        %v278 = vmul.f32 %v228, %v228
        %v279 = vmul.f32 %v229, %v229
        %v280 = vmul.f32 %v230, %v230
        %v281 = vmul.f32 %v231, %v231
        %v282 = vmul.f32 %v232, %v232
        %v283 = vmul.f32 %v233, %v233
        %v284 = vmul.f32 %v234, %v234
        %v285 = vmul.f32 %v235, %v235
        %v286 = vmul.f32 %v236, %v236
        %v287 = vmul.f32 %v237, %v237
        %v288 = vmul.f32 %v238, %v238
        %v289 = vmul.f32 %v239, %v239
        %v290 = vsel %vm240, %v274, 0.0
        %v291 = vsel %vm240, %v275, 0.0
        %v292 = vadd.f32 %v290, %v291
        %v293 = vsel %vm240, %v276, 0.0
        %v294 = vadd.f32 %v292, %v293
        %v295 = vsel %vm240, %v277, 0.0
        %v296 = vadd.f32 %v294, %v295
        %v297 = vsel %vm240, %v278, 0.0
        %v298 = vadd.f32 %v296, %v297
        %v299 = vsel %vm240, %v279, 0.0
        %v300 = vadd.f32 %v298, %v299
        %v301 = vsel %vm240, %v280, 0.0
        %v302 = vadd.f32 %v300, %v301
        %v303 = vsel %vm240, %v281, 0.0
        %v304 = vadd.f32 %v302, %v303
        %v305 = vsel %vm240, %v282, 0.0
        %v306 = vadd.f32 %v304, %v305
        %v307 = vsel %vm240, %v283, 0.0
        %v308 = vadd.f32 %v306, %v307
        %v309 = vsel %vm240, %v284, 0.0
        %v310 = vadd.f32 %v308, %v309
        %v311 = vsel %vm240, %v285, 0.0
        %v312 = vadd.f32 %v310, %v311
        %v313 = vsel %vm240, %v286, 0.0
        %v314 = vadd.f32 %v312, %v313
        %v315 = vsel %vm240, %v287, 0.0
        %v316 = vadd.f32 %v314, %v315
        %v317 = vsel %vm240, %v288, 0.0
        %v318 = vadd.f32 %v316, %v317
        %v319 = vsel %vm240, %v289, 0.0
        %v320 = vadd.f32 %v318, %v319
        %321 = vadd.xlane.f32.xlu0 %v320
        %v322 = vpop.xlane.xlu0 %321
        %v323 = vmul.f32 %v273, 0.00390625
        %v324 = vmul.f32 %v322, 0.00390625
        %v325 = vmul.f32 %v323, %v323
        %v326 = vsub.f32 %v324, %v325
        %v327 = vmax.f32 %v326, 0.0
        %v328 = vadd.f32 %v327, 1e-05
        %v329 = vrsqrt.pop %v328
        %v330 = vmul.f32 %v329, %v328
        %v331 = vmul.f32 %v330, %v329
        %v332 = vmul.f32 0.5, %v331
        %v333 = vsub.f32 1.5, %v332
        %v334 = vmul.f32 %v329, %v333
        %vm335 = vweird.f32 %v328
        %vm336 = vweird.f32 %v329
        %vm337 = vmor %vm335, %vm336
        %v338 = vsel %vm337, %v329, %v334
        %v339 = vld [vmem:[%s219] sm:$0xf]
        %v340 = vmul.f32 %v338, %v339
        %v341 = vld [vmem:[%s223] sm:$0xf]
        %v342 = vmul.f32 %v323, %v340
        %v343 = vsub.f32 %v341, %v342
        %345 = vset.pattern.permute.xlu0 0
        %346 = vperm.xlu0 %345, %v340
        %v347 = vpop.permute.xlu0 %346
        %v349 = vmul.f32 %v224, %v347
        %v350 = vmul.f32 %v225, %v347
        %v351 = vmul.f32 %v226, %v347
        %v352 = vmul.f32 %v227, %v347
        %v353 = vmul.f32 %v228, %v347
        %v354 = vmul.f32 %v229, %v347
        %v355 = vmul.f32 %v230, %v347
        %v356 = vmul.f32 %v231, %v347
        %v357 = vmul.f32 %v232, %v347
        %v358 = vmul.f32 %v233, %v347
        %v359 = vmul.f32 %v234, %v347
        %v360 = vmul.f32 %v235, %v347
        %v361 = vmul.f32 %v236, %v347
        %v362 = vmul.f32 %v237, %v347
        %v363 = vmul.f32 %v238, %v347
        %v364 = vmul.f32 %v239, %v347
        %366 = vset.pattern.permute.xlu0 0
        %367 = vperm.xlu0 %366, %v343
        %v368 = vpop.permute.xlu0 %367
        %v370 = vadd.f32 %v349, %v368
        %v371 = vadd.f32 %v350, %v368
        %v372 = vadd.f32 %v351, %v368
        %v373 = vadd.f32 %v352, %v368
        %v374 = vadd.f32 %v353, %v368
        %v375 = vadd.f32 %v354, %v368
        %v376 = vadd.f32 %v355, %v368
        %v377 = vadd.f32 %v356, %v368
        %v378 = vadd.f32 %v357, %v368
        %v379 = vadd.f32 %v358, %v368
        %v380 = vadd.f32 %v359, %v368
        %v381 = vadd.f32 %v360, %v368
        %v382 = vadd.f32 %v361, %v368
        %v383 = vadd.f32 %v362, %v368
        %v384 = vadd.f32 %v363, %v368
        %v385 = vadd.f32 %v364, %v368
        %386 = vst.msk [vmem:[%s215] sm:$0xf] %vm240, %v370
        %387 = vst.msk [vmem:[%s215 + $0x4] sm:$0xf] %vm240, %v371
        %388 = vst.msk [vmem:[%s215 + $0x8] sm:$0xf] %vm240, %v372
        %389 = vst.msk [vmem:[%s215 + $0xc] sm:$0xf] %vm240, %v373
        %390 = vst.msk [vmem:[%s215 + $0x10] sm:$0xf] %vm240, %v374
        %391 = vst.msk [vmem:[%s215 + $0x14] sm:$0xf] %vm240, %v375
        %392 = vst.msk [vmem:[%s215 + $0x18] sm:$0xf] %vm240, %v376
        %393 = vst.msk [vmem:[%s215 + $0x1c] sm:$0xf] %vm240, %v377
        %394 = vst.msk [vmem:[%s215 + $0x20] sm:$0xf] %vm240, %v378
        %395 = vst.msk [vmem:[%s215 + $0x24] sm:$0xf] %vm240, %v379
        %396 = vst.msk [vmem:[%s215 + $0x28] sm:$0xf] %vm240, %v380
        %397 = vst.msk [vmem:[%s215 + $0x2c] sm:$0xf] %vm240, %v381
        %398 = vst.msk [vmem:[%s215 + $0x30] sm:$0xf] %vm240, %v382
        %399 = vst.msk [vmem:[%s215 + $0x34] sm:$0xf] %vm240, %v383
        %400 = vst.msk [vmem:[%s215 + $0x38] sm:$0xf] %vm240, %v384
        %401 = vst.msk [vmem:[%s215 + $0x3c] sm:$0xf] %vm240, %v385
        %s402 = sand.u32 %s106, 1
        %s403 = scalar_lea.sflag [#allocation4], %s402
        %s404 = sand.u32 %s106, 1
        %s405 = smul.addr %s404, 64
        %s406 = scalar_lea.vmem [#allocation5], %s405
        // Predicated region
        $region37: #{spectrogram_norm.1} parent=31 // pred_check
          %p407 = pneg %p116
        $region38: #{spectrogram_norm.1} parent=31 // pred_check_branch
          %409 = sbr.rel (%p407) target = $region40
        $region39: #{spectrogram_norm.1} parent=31 // pred_region
          %411 = vsyncadd %s403, 0
          %s412 = smul.addr %s20, 4
          %s413 = scalar_lea.hbm %s3, %s412
          %s414 = sshll.u32 %s406, 4
          %s415 = int_to_ptr.vmem [resolvable:$true] %s414
          %s416 = sshll.u32 %s413, 4
          %s417 = int_to_ptr.hbm [resolvable:$true] %s416
          %422 = dma.vmem_to_hbm [thread:$0]  %s415, 1024, %s417, %s403, 64, 128, 4
        $region40: #{spectrogram_norm.1} parent=31 // pred_fallthru
          _
      $region32: #{spectrogram_norm.1} parent=5 // pred_fallthru
        _
      %p423 = scmp.le.s32.totalorder 2, %s15
      // Predicated region
      $region41: #{spectrogram_norm.1} parent=5 // pred_check
        %p424 = pneg %p423
      $region42: #{spectrogram_norm.1} parent=5 // pred_check_branch
        %426 = sbr.rel (%p424) target = $region44
      $region43: #{spectrogram_norm.1} parent=5 // pred_region
        %s427 = ssub.s32 %s15, 2
        // Predicated region
        $region45: #{spectrogram_norm.1} parent=43 // pred_check
          %p428 = pneg %p122
        $region46: #{spectrogram_norm.1} parent=43 // pred_check_branch
          %430 = sbr.rel (%p428) target = $region48
        $region47: #{spectrogram_norm.1} parent=43 // pred_region
          %s431 = sand.u32 %s107, 1
          %s432 = scalar_lea.sflag [#allocation4], %s431
          %s433 = sand.u32 %s107, 1
          %s434 = smul.addr %s433, 64
          %s435 = scalar_lea.vmem [#allocation5], %s434
          %437 = dma.done %s432, 1024
        $region48: #{spectrogram_norm.1} parent=43 // pred_fallthru
          _
      $region44: #{spectrogram_norm.1} parent=5 // pred_fallthru
        _
    $region6: #{spectrogram_norm.1} parent=1 // loop_footer
      %s19 = sadd.s32 1, %s15
    $region7: #{spectrogram_norm.1} parent=1 // loop_footer_branch
      %14 = sbr.rel target = $region3
    $region8: #{spectrogram_norm.1} parent=1 // loop_exit
      _
    %438 = vsyncpa [#allocation3], 1
    %s439 = scalar_lea.sflag [#allocation3], 1
    %440 = vsyncpa %s439, 1
    %441 = vsyncpa [#allocation4], 1
    %s442 = scalar_lea.sflag [#allocation4], 1
    %443 = vsyncpa %s442, 1

</llo_original>
